<compile_context>
chip_gen: v5e
topology: v5e:2x2
jax: 0.10.0
libtpu: 0.0.40
codegen_flags: <defaults>
</compile_context>

<pallas_src>
import jax
import jax.numpy as jnp
from jax.experimental import pallas as pl
from jax.experimental.pallas import tpu as pltpu


LANE = 128     # TPU vreg lane width  -> feature dims padded to multiples of 128
SUBLANE = 8    # f32 sublane width    -> batch tiles are multiples of 8


def _round_up(n, m):
    return (n + m - 1) // m * m


def _pad2(a, rows, cols):
    return jnp.pad(a, ((0, rows - a.shape[0]), (0, cols - a.shape[1])))


def mlp5_kernel(x_ref, w1_ref, b1_ref, w2_ref, b2_ref,
                w3_ref, b3_ref, w4_ref, b4_ref, o_ref):
    # Four fused (matmul + bias + sigmoid) layers on one lane-dense batch tile.
    # Weights/biases are VMEM-resident across the batch grid; only the x tile
    # and out tile move per grid step.
    x = x_ref[...]
    h = jax.nn.sigmoid(
        jnp.dot(x, w1_ref[...], preferred_element_type=jnp.float32) + b1_ref[...])
    h = jax.nn.sigmoid(
        jnp.dot(h, w2_ref[...], preferred_element_type=jnp.float32) + b2_ref[...])
    h = jax.nn.sigmoid(
        jnp.dot(h, w3_ref[...], preferred_element_type=jnp.float32) + b3_ref[...])
    o_ref[...] = jax.nn.sigmoid(
        jnp.dot(h, w4_ref[...], preferred_element_type=jnp.float32)
        + b4_ref[...]).astype(o_ref.dtype)


def mlp5_forward(x, params, *, tile_b=256):
    """x: (B, input_size); params: 4 x (W (in,out), b (1,out)). Returns (B, output_size)."""
    (w1, b1), (w2, b2), (w3, b3), (w4, b4) = params
    B, in_size = x.shape
    hid = w1.shape[1]
    out_size = w4.shape[1]

    # ---- lane-dense padding (multiples of 128 on every feature axis) ----
    in_p = _round_up(in_size, LANE)
    hid_p = _round_up(hid, LANE)
    out_p = _round_up(out_size, LANE)

    # ---- batch tiling: one parallel grid axis over B ----
    tile_b = min(tile_b, _round_up(B, SUBLANE))
    tile_b = _round_up(tile_b, SUBLANE)
    b_pad = _round_up(B, tile_b)
    grid = (b_pad // tile_b,)

    xp = _pad2(x, b_pad, in_p)
    w1p, b1p = _pad2(w1, in_p, hid_p), _pad2(b1, 1, hid_p)
    w2p, b2p = _pad2(w2, hid_p, hid_p), _pad2(b2, 1, hid_p)
    w3p, b3p = _pad2(w3, hid_p, hid_p), _pad2(b3, 1, hid_p)
    w4p, b4p = _pad2(w4, hid_p, out_p), _pad2(b4, 1, out_p)

    def resident(shape):
        # Same block index every grid step -> weights/biases stay VMEM-resident.
        return pl.BlockSpec(shape, lambda i: (0, 0))

    # Advisory cost so XLA doesn't serialize surrounding ops around the call.
    flops = 2 * b_pad * (in_p * hid_p + 2 * hid_p * hid_p + hid_p * out_p)
    transcendentals = b_pad * (3 * hid_p + out_p)
    bytes_accessed = 4 * (xp.size + w1p.size + b1p.size + w2p.size + b2p.size
                          + w3p.size + b3p.size + w4p.size + b4p.size
                          + b_pad * out_p)

    out = pl.pallas_call(
        mlp5_kernel,
        out_shape=jax.ShapeDtypeStruct((b_pad, out_p), jnp.float32),
        grid_spec=pltpu.PrefetchScalarGridSpec(
            num_scalar_prefetch=0,
            grid=grid,
            in_specs=[
                pl.BlockSpec((tile_b, in_p), lambda i: (i, 0)),   # x tile, pipelined
                resident((in_p, hid_p)), resident((1, hid_p)),    # layer 1
                resident((hid_p, hid_p)), resident((1, hid_p)),   # layer 2
                resident((hid_p, hid_p)), resident((1, hid_p)),   # layer 3
                resident((hid_p, out_p)), resident((1, out_p)),   # layer 4
            ],
            out_specs=pl.BlockSpec((tile_b, out_p), lambda i: (i, 0)),
        ),
        compiler_params=pltpu.CompilerParams(
            dimension_semantics=("parallel",),          # megacore / 2nd TC
            vmem_limit_bytes=32 * 1024 * 1024,          # plenty for this kernel, safe on all chips
        ),
        cost_estimate=pl.CostEstimate(
            flops=flops,
            transcendentals=transcendentals,
            bytes_accessed=bytes_accessed,
        ),
    )(xp, w1p, b1p, w2p, b2p, w3p, b3p, w4p, b4p)

    # Strip batch and lane padding.
    return out[:B, :out_size]


def init_linear(key, in_features, out_features):
    # Deterministic init mimicking nn.Linear's uniform(-1/sqrt(in), 1/sqrt(in)).
    # Weights stored as (in, out) so each layer is y = sigmoid(x @ W + b)
    # (transposed vs. PyTorch's (out, in) storage, same math).
    kw, kb = jax.random.split(key)
    bound = 1.0 / jnp.sqrt(jnp.float32(in_features))
    w = jax.random.uniform(kw, (in_features, out_features), jnp.float32,
                           minval=-bound, maxval=bound)
    b = jax.random.uniform(kb, (1, out_features), jnp.float32,
                           minval=-bound, maxval=bound)
    return w, b


if __name__ == "__main__":
    input_size, hidden_size, output_size = 16, 32, 8
    batch = 8

    key = jax.random.PRNGKey(0)
    k_x, k1, k2, k3, k4 = jax.random.split(key, 5)

    x = jax.random.normal(k_x, (batch, input_size), jnp.float32)
    params = (
        init_linear(k1, input_size, hidden_size),
        init_linear(k2, hidden_size, hidden_size),
        init_linear(k3, hidden_size, hidden_size),
        init_linear(k4, hidden_size, output_size),
    )

    out = mlp5_forward(x, params)
    jax.block_until_ready(out)

    # Pure-JAX reference check of the fused kernel (unpadded params).
    ref = x
    for w, b in params:
        ref = jax.nn.sigmoid(ref @ w + b)
    assert out.shape == (batch, output_size)
    assert jnp.allclose(out, ref, atol=1e-5, rtol=1e-5)

    print("KERNEL_OK")
</pallas_src>

<mosaic_0001>
module attributes {stable_mosaic.version = 11 : i64} {
  func.func @mlp5_kernel(%arg0: i32, %arg1: memref<8x128xf32, #tpu.memory_space<vmem>>, %arg2: memref<128x128xf32, #tpu.memory_space<vmem>>, %arg3: memref<1x128xf32, #tpu.memory_space<vmem>>, %arg4: memref<128x128xf32, #tpu.memory_space<vmem>>, %arg5: memref<1x128xf32, #tpu.memory_space<vmem>>, %arg6: memref<128x128xf32, #tpu.memory_space<vmem>>, %arg7: memref<1x128xf32, #tpu.memory_space<vmem>>, %arg8: memref<128x128xf32, #tpu.memory_space<vmem>>, %arg9: memref<1x128xf32, #tpu.memory_space<vmem>>, %arg10: memref<8x128xf32, #tpu.memory_space<vmem>>) attributes {dimension_semantics = [#tpu.dimension_semantics<parallel>], iteration_bounds = array<i64: 1>, scalar_prefetch = 0 : i64, scratch_operands = 0 : i64, tpu.core_type = #tpu.core_type<tc>, window_params = [{transform_indices = @transform_0, window_bounds = array<i64: 8, 128>}, {pipeline_mode = #tpu.pipeline_mode<synchronous>, transform_indices = @transform_1, window_bounds = array<i64: 128, 128>}, {pipeline_mode = #tpu.pipeline_mode<synchronous>, transform_indices = @transform_2, window_bounds = array<i64: 1, 128>}, {pipeline_mode = #tpu.pipeline_mode<synchronous>, transform_indices = @transform_3, window_bounds = array<i64: 128, 128>}, {pipeline_mode = #tpu.pipeline_mode<synchronous>, transform_indices = @transform_4, window_bounds = array<i64: 1, 128>}, {pipeline_mode = #tpu.pipeline_mode<synchronous>, transform_indices = @transform_5, window_bounds = array<i64: 128, 128>}, {pipeline_mode = #tpu.pipeline_mode<synchronous>, transform_indices = @transform_6, window_bounds = array<i64: 1, 128>}, {pipeline_mode = #tpu.pipeline_mode<synchronous>, transform_indices = @transform_7, window_bounds = array<i64: 128, 128>}, {pipeline_mode = #tpu.pipeline_mode<synchronous>, transform_indices = @transform_8, window_bounds = array<i64: 1, 128>}, {transform_indices = @transform_9, window_bounds = array<i64: 8, 128>}]} {
    %c0 = arith.constant 0 : index
    %c0_0 = arith.constant 0 : index
    %0 = vector.load %arg1[%c0, %c0_0] : memref<8x128xf32, #tpu.memory_space<vmem>>, vector<8x128xf32>
    %c0_1 = arith.constant 0 : index
    %c0_2 = arith.constant 0 : index
    %1 = vector.load %arg2[%c0_1, %c0_2] : memref<128x128xf32, #tpu.memory_space<vmem>>, vector<128x128xf32>
    %cst = arith.constant dense<0.000000e+00> : vector<8x128xf32>
    %2 = tpu.matmul %0, %1, %cst {dimension_numbers = #tpu.dot_dimension_numbers<[1], [0], [0], [1], [0, 0, 1, 1], [], []>} : vector<8x128xf32>, vector<128x128xf32>, vector<8x128xf32> -> vector<8x128xf32>
    %c0_3 = arith.constant 0 : index
    %c0_4 = arith.constant 0 : index
    %3 = vector.load %arg3[%c0_3, %c0_4] : memref<1x128xf32, #tpu.memory_space<vmem>>, vector<1x128xf32>
    %4 = vector.broadcast %3 : vector<1x128xf32> to vector<8x128xf32>
    %5 = arith.addf %2, %4 : vector<8x128xf32>
    %6 = arith.negf %5 : vector<8x128xf32>
    %7 = math.exp %6 : vector<8x128xf32>
    %cst_5 = arith.constant 1.000000e+00 : f32
    %8 = vector.broadcast %cst_5 : f32 to vector<8x128xf32>
    %9 = arith.addf %8, %7 : vector<8x128xf32>
    %10 = arith.divf %8, %9 : vector<8x128xf32>
    %c0_6 = arith.constant 0 : index
    %c0_7 = arith.constant 0 : index
    %11 = vector.load %arg4[%c0_6, %c0_7] : memref<128x128xf32, #tpu.memory_space<vmem>>, vector<128x128xf32>
    %cst_8 = arith.constant dense<0.000000e+00> : vector<8x128xf32>
    %12 = tpu.matmul %10, %11, %cst_8 {dimension_numbers = #tpu.dot_dimension_numbers<[1], [0], [0], [1], [0, 0, 1, 1], [], []>} : vector<8x128xf32>, vector<128x128xf32>, vector<8x128xf32> -> vector<8x128xf32>
    %c0_9 = arith.constant 0 : index
    %c0_10 = arith.constant 0 : index
    %13 = vector.load %arg5[%c0_9, %c0_10] : memref<1x128xf32, #tpu.memory_space<vmem>>, vector<1x128xf32>
    %14 = vector.broadcast %13 : vector<1x128xf32> to vector<8x128xf32>
    %15 = arith.addf %12, %14 : vector<8x128xf32>
    %16 = arith.negf %15 : vector<8x128xf32>
    %17 = math.exp %16 : vector<8x128xf32>
    %cst_11 = arith.constant 1.000000e+00 : f32
    %18 = vector.broadcast %cst_11 : f32 to vector<8x128xf32>
    %19 = arith.addf %18, %17 : vector<8x128xf32>
    %20 = arith.divf %18, %19 : vector<8x128xf32>
    %c0_12 = arith.constant 0 : index
    %c0_13 = arith.constant 0 : index
    %21 = vector.load %arg6[%c0_12, %c0_13] : memref<128x128xf32, #tpu.memory_space<vmem>>, vector<128x128xf32>
    %cst_14 = arith.constant dense<0.000000e+00> : vector<8x128xf32>
    %22 = tpu.matmul %20, %21, %cst_14 {dimension_numbers = #tpu.dot_dimension_numbers<[1], [0], [0], [1], [0, 0, 1, 1], [], []>} : vector<8x128xf32>, vector<128x128xf32>, vector<8x128xf32> -> vector<8x128xf32>
    %c0_15 = arith.constant 0 : index
    %c0_16 = arith.constant 0 : index
    %23 = vector.load %arg7[%c0_15, %c0_16] : memref<1x128xf32, #tpu.memory_space<vmem>>, vector<1x128xf32>
    %24 = vector.broadcast %23 : vector<1x128xf32> to vector<8x128xf32>
    %25 = arith.addf %22, %24 : vector<8x128xf32>
    %26 = arith.negf %25 : vector<8x128xf32>
    %27 = math.exp %26 : vector<8x128xf32>
    %cst_17 = arith.constant 1.000000e+00 : f32
    %28 = vector.broadcast %cst_17 : f32 to vector<8x128xf32>
    %29 = arith.addf %28, %27 : vector<8x128xf32>
    %30 = arith.divf %28, %29 : vector<8x128xf32>
    %c0_18 = arith.constant 0 : index
    %c0_19 = arith.constant 0 : index
    %31 = vector.load %arg8[%c0_18, %c0_19] : memref<128x128xf32, #tpu.memory_space<vmem>>, vector<128x128xf32>
    %cst_20 = arith.constant dense<0.000000e+00> : vector<8x128xf32>
    %32 = tpu.matmul %30, %31, %cst_20 {dimension_numbers = #tpu.dot_dimension_numbers<[1], [0], [0], [1], [0, 0, 1, 1], [], []>} : vector<8x128xf32>, vector<128x128xf32>, vector<8x128xf32> -> vector<8x128xf32>
    %c0_21 = arith.constant 0 : index
    %c0_22 = arith.constant 0 : index
    %33 = vector.load %arg9[%c0_21, %c0_22] : memref<1x128xf32, #tpu.memory_space<vmem>>, vector<1x128xf32>
    %34 = vector.broadcast %33 : vector<1x128xf32> to vector<8x128xf32>
    %35 = arith.addf %32, %34 : vector<8x128xf32>
    %36 = arith.negf %35 : vector<8x128xf32>
    %37 = math.exp %36 : vector<8x128xf32>
    %cst_23 = arith.constant 1.000000e+00 : f32
    %38 = vector.broadcast %cst_23 : f32 to vector<8x128xf32>
    %39 = arith.addf %38, %37 : vector<8x128xf32>
    %40 = arith.divf %38, %39 : vector<8x128xf32>
    %c0_24 = arith.constant 0 : index
    %c0_25 = arith.constant 0 : index
    %41 = vector.load %arg10[%c0_24, %c0_25] : memref<8x128xf32, #tpu.memory_space<vmem>>, vector<8x128xf32>
    tpu.vector_store %arg10[%c0_24, %c0_25], %40 {strides = array<i32>} : memref<8x128xf32, #tpu.memory_space<vmem>>, vector<8x128xf32>,
    return
  }
  func.func @transform_0(%arg0: i32) -> (i32, i32) {
    %c0_i32 = arith.constant 0 : i32
    %c0_i32_0 = arith.constant 0 : i32
    return %arg0, %c0_i32 : i32, i32
  }
  func.func @transform_1(%arg0: i32) -> (i32, i32) {
    %c0_i32 = arith.constant 0 : i32
    %c0_i32_0 = arith.constant 0 : i32
    %c0_i32_1 = arith.constant 0 : i32
    return %c0_i32, %c0_i32_0 : i32, i32
  }
  func.func @transform_2(%arg0: i32) -> (i32, i32) {
    %c0_i32 = arith.constant 0 : i32
    %c0_i32_0 = arith.constant 0 : i32
    %c0_i32_1 = arith.constant 0 : i32
    return %c0_i32, %c0_i32_0 : i32, i32
  }
  func.func @transform_3(%arg0: i32) -> (i32, i32) {
    %c0_i32 = arith.constant 0 : i32
    %c0_i32_0 = arith.constant 0 : i32
    %c0_i32_1 = arith.constant 0 : i32
    return %c0_i32, %c0_i32_0 : i32, i32
  }
  func.func @transform_4(%arg0: i32) -> (i32, i32) {
    %c0_i32 = arith.constant 0 : i32
    %c0_i32_0 = arith.constant 0 : i32
    %c0_i32_1 = arith.constant 0 : i32
    return %c0_i32, %c0_i32_0 : i32, i32
  }
  func.func @transform_5(%arg0: i32) -> (i32, i32) {
    %c0_i32 = arith.constant 0 : i32
    %c0_i32_0 = arith.constant 0 : i32
    %c0_i32_1 = arith.constant 0 : i32
    return %c0_i32, %c0_i32_0 : i32, i32
  }
  func.func @transform_6(%arg0: i32) -> (i32, i32) {
    %c0_i32 = arith.constant 0 : i32
    %c0_i32_0 = arith.constant 0 : i32
    %c0_i32_1 = arith.constant 0 : i32
    return %c0_i32, %c0_i32_0 : i32, i32
  }
  func.func @transform_7(%arg0: i32) -> (i32, i32) {
    %c0_i32 = arith.constant 0 : i32
    %c0_i32_0 = arith.constant 0 : i32
    %c0_i32_1 = arith.constant 0 : i32
    return %c0_i32, %c0_i32_0 : i32, i32
  }
  func.func @transform_8(%arg0: i32) -> (i32, i32) {
    %c0_i32 = arith.constant 0 : i32
    %c0_i32_0 = arith.constant 0 : i32
    %c0_i32_1 = arith.constant 0 : i32
    return %c0_i32, %c0_i32_0 : i32, i32
  }
  func.func @transform_9(%arg0: i32) -> (i32, i32) {
    %c0_i32 = arith.constant 0 : i32
    %c0_i32_0 = arith.constant 0 : i32
    return %arg0, %c0_i32 : i32, i32
  }
}

</mosaic_0001>

<llo_original>
// kernel: tpu_custom_call.1
$region0: #{tpu_custom_call.1}
  #allocation0 [shape = 'u32[]', space=smem, size = 0x4, offset = 0x4, fixed_abs, tag = 'smem constant byte address 0x4 - core index']
  #allocation1 [shape = 'u32[72,128]{1,0:T(1,128)}', space=vmem, size = 0x9000, scoped, tag = 'internal scratch']
  %s0 = inlined_call_operand.hbm [shape: f32[8,128], index: 0, kind: input, shape index: {}]
  %s1 = inlined_call_operand.hbm [shape: f32[128,128], index: 1, kind: input, shape index: {}]
  %s2 = inlined_call_operand.vmem [shape: f32[1,128], index: 2, kind: input, shape index: {}]
  %s3 = inlined_call_operand.hbm [shape: f32[128,128], index: 3, kind: input, shape index: {}]
  %s4 = inlined_call_operand.vmem [shape: f32[1,128], index: 4, kind: input, shape index: {}]
  %s5 = inlined_call_operand.hbm [shape: f32[128,128], index: 5, kind: input, shape index: {}]
  %s6 = inlined_call_operand.vmem [shape: f32[1,128], index: 6, kind: input, shape index: {}]
  %s7 = inlined_call_operand.hbm [shape: f32[128,128], index: 7, kind: input, shape index: {}]
  %s8 = inlined_call_operand.vmem [shape: f32[1,128], index: 8, kind: input, shape index: {}]
  %s9 = inlined_call_operand.hbm [shape: f32[8,128], index: 9, kind: output, shape index: {}]
  %s10 = sld [smem:[#allocation0]]
  $region66: #{tpu_custom_call.1} parent=0
    _
  %s12 = ssub.s32 1, %s10
  %s13 = scalar_select 0, %s12, %s10
  $region1: #{tpu_custom_call.1} parent=0
    #allocation2 [shape = 'u8[4096]{0}', space=vmem, size = 0x1000, scoped, tag = 'input window, operand 0, single buffered']
    #allocation3 [shape = 's32[1]{0}', space=sflag, size = 0x4, scoped, tag = 'scoped memory for tpu_custom_call.1']
    #allocation4 [shape = 's32[1]{0}', space=sflag, size = 0x4, scoped, tag = 'scoped memory for tpu_custom_call.1']
    #allocation5 [shape = 'u8[65536]{0}', space=vmem, size = 0x10000, scoped, tag = 'input window, operand 1, single buffered']
    #allocation6 [shape = 's32[1]{0}', space=sflag, size = 0x4, scoped, tag = 'scoped memory for tpu_custom_call.1']
    #allocation7 [shape = 'u8[65536]{0}', space=vmem, size = 0x10000, scoped, tag = 'input window, operand 3, single buffered']
    #allocation8 [shape = 'u8[65536]{0}', space=vmem, size = 0x10000, scoped, tag = 'input window, operand 5, single buffered']
    #allocation9 [shape = 's32[1]{0}', space=sflag, size = 0x4, scoped, tag = 'scoped memory for tpu_custom_call.1']
    #allocation10 [shape = 'u8[65536]{0}', space=vmem, size = 0x10000, scoped, tag = 'input window, operand 7, single buffered']
    #allocation11 [shape = 'u8[4096]{0}', space=vmem, size = 0x1000, scoped, tag = 'output window, operand 0, single buffered']
    %14 = vsyncpa [#allocation3], 0
    %15 = vsyncpa [#allocation6], 0
    %16 = vsyncpa [#allocation9], 0
    %17 = vsyncpa [#allocation4], 0
    // Predicated region
    $region2: #{tpu_custom_call.1} parent=1 // pred_check
      _
    $region3: #{tpu_custom_call.1} parent=1 // pred_check_branch
      %19 = sbr.rel (0) target = $region5
    $region4: #{tpu_custom_call.1} parent=1 // pred_region
      %21 = vsyncadd [#allocation3], 0
      %s23 = sshll.u32 %s0, 4
      %s24 = int_to_ptr.hbm [resolvable:$true] %s23
      %s25 = sshll.u32 [#allocation2], 4
      %s26 = int_to_ptr.vmem [resolvable:$true] %s25
      %28 = dma.hbm_to_vmem [thread:$0]  %s24, 128, %s26, [#allocation3]
    $region5: #{tpu_custom_call.1} parent=1 // pred_fallthru
      _
    // Predicated region
    $region6: #{tpu_custom_call.1} parent=1 // pred_check
      _
    $region7: #{tpu_custom_call.1} parent=1 // pred_check_branch
      %30 = sbr.rel (0) target = $region9
    $region8: #{tpu_custom_call.1} parent=1 // pred_region
      %32 = vsyncadd [#allocation6], 0
      %s33 = sshll.u32 %s1, 4
      %s34 = int_to_ptr.hbm [resolvable:$true] %s33
      %s35 = sshll.u32 [#allocation5], 4
      %s36 = int_to_ptr.vmem [resolvable:$true] %s35
      %41 = dma.hbm_to_vmem [thread:$0]  %s34, 2048, %s36, [#allocation6], 128, 128, 8
    $region9: #{tpu_custom_call.1} parent=1 // pred_fallthru
      _
    // Predicated region
    $region10: #{tpu_custom_call.1} parent=1 // pred_check
      _
    $region11: #{tpu_custom_call.1} parent=1 // pred_check_branch
      %43 = sbr.rel (0) target = $region13
    $region12: #{tpu_custom_call.1} parent=1 // pred_region
      _
    $region13: #{tpu_custom_call.1} parent=1 // pred_fallthru
      _
    // Predicated region
    $region14: #{tpu_custom_call.1} parent=1 // pred_check
      _
    $region15: #{tpu_custom_call.1} parent=1 // pred_check_branch
      %45 = sbr.rel (0) target = $region17
    $region16: #{tpu_custom_call.1} parent=1 // pred_region
      %47 = vsyncadd [#allocation6], 0
      %s48 = sshll.u32 %s3, 4
      %s49 = int_to_ptr.hbm [resolvable:$true] %s48
      %s50 = sshll.u32 [#allocation7], 4
      %s51 = int_to_ptr.vmem [resolvable:$true] %s50
      %56 = dma.hbm_to_vmem [thread:$0]  %s49, 2048, %s51, [#allocation6], 128, 128, 8
    $region17: #{tpu_custom_call.1} parent=1 // pred_fallthru
      _
    // Predicated region
    $region18: #{tpu_custom_call.1} parent=1 // pred_check
      _
    $region19: #{tpu_custom_call.1} parent=1 // pred_check_branch
      %58 = sbr.rel (0) target = $region21
    $region20: #{tpu_custom_call.1} parent=1 // pred_region
      _
    $region21: #{tpu_custom_call.1} parent=1 // pred_fallthru
      _
    // Predicated region
    $region22: #{tpu_custom_call.1} parent=1 // pred_check
      _
    $region23: #{tpu_custom_call.1} parent=1 // pred_check_branch
      %60 = sbr.rel (0) target = $region25
    $region24: #{tpu_custom_call.1} parent=1 // pred_region
      %62 = vsyncadd [#allocation9], 0
      %s63 = sshll.u32 %s5, 4
      %s64 = int_to_ptr.hbm [resolvable:$true] %s63
      %s65 = sshll.u32 [#allocation8], 4
      %s66 = int_to_ptr.vmem [resolvable:$true] %s65
      %71 = dma.hbm_to_vmem [thread:$0]  %s64, 2048, %s66, [#allocation9], 128, 128, 8
    $region25: #{tpu_custom_call.1} parent=1 // pred_fallthru
      _
    // Predicated region
    $region26: #{tpu_custom_call.1} parent=1 // pred_check
      _
    $region27: #{tpu_custom_call.1} parent=1 // pred_check_branch
      %73 = sbr.rel (0) target = $region29
    $region28: #{tpu_custom_call.1} parent=1 // pred_region
      _
    $region29: #{tpu_custom_call.1} parent=1 // pred_fallthru
      _
    // Predicated region
    $region30: #{tpu_custom_call.1} parent=1 // pred_check
      _
    $region31: #{tpu_custom_call.1} parent=1 // pred_check_branch
      %75 = sbr.rel (0) target = $region33
    $region32: #{tpu_custom_call.1} parent=1 // pred_region
      %77 = vsyncadd [#allocation9], 0
      %s78 = sshll.u32 %s7, 4
      %s79 = int_to_ptr.hbm [resolvable:$true] %s78
      %s80 = sshll.u32 [#allocation10], 4
      %s81 = int_to_ptr.vmem [resolvable:$true] %s80
      %86 = dma.hbm_to_vmem [thread:$0]  %s79, 2048, %s81, [#allocation9], 128, 128, 8
    $region33: #{tpu_custom_call.1} parent=1 // pred_fallthru
      _
    // Predicated region
    $region34: #{tpu_custom_call.1} parent=1 // pred_check
      _
    $region35: #{tpu_custom_call.1} parent=1 // pred_check_branch
      %88 = sbr.rel (0) target = $region37
    $region36: #{tpu_custom_call.1} parent=1 // pred_region
      _
    $region37: #{tpu_custom_call.1} parent=1 // pred_fallthru
      _
    // Predicated region
    $region38: #{tpu_custom_call.1} parent=1 // pred_check
      _
    $region39: #{tpu_custom_call.1} parent=1 // pred_check_branch
      %90 = sbr.rel (0) target = $region41
    $region40: #{tpu_custom_call.1} parent=1 // pred_region
      %92 = dma.done [#allocation3], 128
    $region41: #{tpu_custom_call.1} parent=1 // pred_fallthru
      _
    // Predicated region
    $region42: #{tpu_custom_call.1} parent=1 // pred_check
      _
    $region43: #{tpu_custom_call.1} parent=1 // pred_check_branch
      %94 = sbr.rel (0) target = $region45
    $region44: #{tpu_custom_call.1} parent=1 // pred_region
      %96 = dma.done [#allocation6], 2048
    $region45: #{tpu_custom_call.1} parent=1 // pred_fallthru
      _
    // Predicated region
    $region46: #{tpu_custom_call.1} parent=1 // pred_check
      _
    $region47: #{tpu_custom_call.1} parent=1 // pred_check_branch
      %98 = sbr.rel (0) target = $region49
    $region48: #{tpu_custom_call.1} parent=1 // pred_region
      %100 = dma.done [#allocation6], 2048
    $region49: #{tpu_custom_call.1} parent=1 // pred_fallthru
      _
    // Predicated region
    $region50: #{tpu_custom_call.1} parent=1 // pred_check
      _
    $region51: #{tpu_custom_call.1} parent=1 // pred_check_branch
      %102 = sbr.rel (0) target = $region53
    $region52: #{tpu_custom_call.1} parent=1 // pred_region
      %104 = dma.done [#allocation9], 2048
    $region53: #{tpu_custom_call.1} parent=1 // pred_fallthru
      _
    // Predicated region
    $region54: #{tpu_custom_call.1} parent=1 // pred_check
      _
    $region55: #{tpu_custom_call.1} parent=1 // pred_check_branch
      %106 = sbr.rel (0) target = $region57
    $region56: #{tpu_custom_call.1} parent=1 // pred_region
      %108 = dma.done [#allocation9], 2048
    $region57: #{tpu_custom_call.1} parent=1 // pred_fallthru
      _
    %v109 = vld [vmem:[#allocation2] sm:$0xff]
    %v110 = vld [vmem:[#allocation5] sm:$0xff]
    %v111 = vld [vmem:[#allocation5 + $0x8] sm:$0xff]
    %v112 = vld [vmem:[#allocation5 + $0x10] sm:$0xff]
    %v113 = vld [vmem:[#allocation5 + $0x18] sm:$0xff]
    %v114 = vld [vmem:[#allocation5 + $0x20] sm:$0xff]
    %v115 = vld [vmem:[#allocation5 + $0x28] sm:$0xff]
    %v116 = vld [vmem:[#allocation5 + $0x30] sm:$0xff]
    %v117 = vld [vmem:[#allocation5 + $0x38] sm:$0xff]
    %v118 = vld [vmem:[#allocation5 + $0x40] sm:$0xff]
    %v119 = vld [vmem:[#allocation5 + $0x48] sm:$0xff]
    %v120 = vld [vmem:[#allocation5 + $0x50] sm:$0xff]
    %v121 = vld [vmem:[#allocation5 + $0x58] sm:$0xff]
    %v122 = vld [vmem:[#allocation5 + $0x60] sm:$0xff]
    %v123 = vld [vmem:[#allocation5 + $0x68] sm:$0xff]
    %v124 = vld [vmem:[#allocation5 + $0x70] sm:$0xff]
    %v125 = vld [vmem:[#allocation5 + $0x78] sm:$0xff]
    %v126 = vld [vmem:[%s2] sm:$0x1]
    %v128 = vperm.slane %v126, 0
    %130 = vmatpush.msra.mxu0 %v125
    %131 = vmatpush.msra.mxu0 %v124
    %132 = vmatpush.msra.mxu0 %v123
    %133 = vmatpush.msra.mxu0 %v122
    %134 = vmatpush.msra.mxu0 %v121
    %135 = vmatpush.msra.mxu0 %v120
    %136 = vmatpush.msra.mxu0 %v119
    %137 = vmatpush.msra.mxu0 %v118
    %138 = vmatpush.msra.mxu0 %v117
    %139 = vmatpush.msra.mxu0 %v116
    %140 = vmatpush.msra.mxu0 %v115
    %141 = vmatpush.msra.mxu0 %v114
    %142 = vmatpush.msra.mxu0 %v113
    %143 = vmatpush.msra.mxu0 %v112
    %144 = vmatpush.msra.mxu0 %v111
    %145 = vmatpush.msra.mxu0 %v110
    %146 = vmatmul.f32.gmra.mxu0 %v109
    %v147 = vpop.f32.mrf.mxu0
    %v148 = vadd.f32 %v128, %v147
    %149 = vdwg.mxu0
    %v150 = vxor.u32 %v148, 2147483648
    %v151 = vmul.f32 %v150, 1.442695
    %v152 = vpow.pop %v151
    %v153 = vadd.f32 %v152, 1.0
    %v154 = vrcp.pop %v153
    %v155 = vmul.f32 %v153, %v154
    %v156 = vsub.f32 1.0, %v155
    %v157 = vmul.f32 %v154, %v156
    %v158 = vadd.f32 %v154, %v157
    %vm159 = vweird.f32 %v153
    %vm160 = vweird.f32 %v154
    %vm161 = vmor %vm159, %vm160
    %v162 = vsel %vm161, %v154, %v158
    %v163 = vand.u32 2147483647, %v153
    %vm164 = vcmp.eq.f32.partialorder %v163, 8.507059e+37
    %v165 = vand.u32 %v153, 2147483648
    %v166 = vor.u32 1.1754944e-38, %v165
    %v167 = vsel %vm164, %v166, %v162
    %v168 = vmul.f32 1.0, %v167
    %v169 = vld [vmem:[#allocation7] sm:$0xff]
    %v170 = vld [vmem:[#allocation7 + $0x8] sm:$0xff]
    %v171 = vld [vmem:[#allocation7 + $0x10] sm:$0xff]
    %v172 = vld [vmem:[#allocation7 + $0x18] sm:$0xff]
    %v173 = vld [vmem:[#allocation7 + $0x20] sm:$0xff]
    %v174 = vld [vmem:[#allocation7 + $0x28] sm:$0xff]
    %v175 = vld [vmem:[#allocation7 + $0x30] sm:$0xff]
    %v176 = vld [vmem:[#allocation7 + $0x38] sm:$0xff]
    %v177 = vld [vmem:[#allocation7 + $0x40] sm:$0xff]
    %v178 = vld [vmem:[#allocation7 + $0x48] sm:$0xff]
    %v179 = vld [vmem:[#allocation7 + $0x50] sm:$0xff]
    %v180 = vld [vmem:[#allocation7 + $0x58] sm:$0xff]
    %v181 = vld [vmem:[#allocation7 + $0x60] sm:$0xff]
    %v182 = vld [vmem:[#allocation7 + $0x68] sm:$0xff]
    %v183 = vld [vmem:[#allocation7 + $0x70] sm:$0xff]
    %v184 = vld [vmem:[#allocation7 + $0x78] sm:$0xff]
    %v185 = vld [vmem:[%s4] sm:$0x1]
    %v187 = vperm.slane %v185, 0
    %189 = vmatpush.msra.mxu0 %v184
    %190 = vmatpush.msra.mxu0 %v183
    %191 = vmatpush.msra.mxu0 %v182
    %192 = vmatpush.msra.mxu0 %v181
    %193 = vmatpush.msra.mxu0 %v180
    %194 = vmatpush.msra.mxu0 %v179
    %195 = vmatpush.msra.mxu0 %v178
    %196 = vmatpush.msra.mxu0 %v177
    %197 = vmatpush.msra.mxu0 %v176
    %198 = vmatpush.msra.mxu0 %v175
    %199 = vmatpush.msra.mxu0 %v174
    %200 = vmatpush.msra.mxu0 %v173
    %201 = vmatpush.msra.mxu0 %v172
    %202 = vmatpush.msra.mxu0 %v171
    %203 = vmatpush.msra.mxu0 %v170
    %204 = vmatpush.msra.mxu0 %v169
    %205 = vmatmul.f32.gmra.mxu0 %v168
    %v206 = vpop.f32.mrf.mxu0
    %v207 = vadd.f32 %v187, %v206
    %208 = vdwg.mxu0
    %v209 = vxor.u32 %v207, 2147483648
    %v210 = vmul.f32 %v209, 1.442695
    %v211 = vpow.pop %v210
    %v212 = vadd.f32 %v211, 1.0
    %v213 = vrcp.pop %v212
    %v214 = vmul.f32 %v212, %v213
    %v215 = vsub.f32 1.0, %v214
    %v216 = vmul.f32 %v213, %v215
    %v217 = vadd.f32 %v213, %v216
    %vm218 = vweird.f32 %v212
    %vm219 = vweird.f32 %v213
    %vm220 = vmor %vm218, %vm219
    %v221 = vsel %vm220, %v213, %v217
    %v222 = vand.u32 2147483647, %v212
    %vm223 = vcmp.eq.f32.partialorder %v222, 8.507059e+37
    %v224 = vand.u32 %v212, 2147483648
    %v225 = vor.u32 1.1754944e-38, %v224
    %v226 = vsel %vm223, %v225, %v221
    %v227 = vmul.f32 1.0, %v226
    %v228 = vld [vmem:[#allocation8] sm:$0xff]
    %v229 = vld [vmem:[#allocation8 + $0x8] sm:$0xff]
    %v230 = vld [vmem:[#allocation8 + $0x10] sm:$0xff]
    %v231 = vld [vmem:[#allocation8 + $0x18] sm:$0xff]
    %v232 = vld [vmem:[#allocation8 + $0x20] sm:$0xff]
    %v233 = vld [vmem:[#allocation8 + $0x28] sm:$0xff]
    %v234 = vld [vmem:[#allocation8 + $0x30] sm:$0xff]
    %v235 = vld [vmem:[#allocation8 + $0x38] sm:$0xff]
    %v236 = vld [vmem:[#allocation8 + $0x40] sm:$0xff]
    %v237 = vld [vmem:[#allocation8 + $0x48] sm:$0xff]
    %v238 = vld [vmem:[#allocation8 + $0x50] sm:$0xff]
    %v239 = vld [vmem:[#allocation8 + $0x58] sm:$0xff]
    %v240 = vld [vmem:[#allocation8 + $0x60] sm:$0xff]
    %v241 = vld [vmem:[#allocation8 + $0x68] sm:$0xff]
    %v242 = vld [vmem:[#allocation8 + $0x70] sm:$0xff]
    %v243 = vld [vmem:[#allocation8 + $0x78] sm:$0xff]
    %v244 = vld [vmem:[%s6] sm:$0x1]
    %v246 = vperm.slane %v244, 0
    %248 = vmatpush.msra.mxu0 %v243
    %249 = vmatpush.msra.mxu0 %v242
    %250 = vmatpush.msra.mxu0 %v241
    %251 = vmatpush.msra.mxu0 %v240
    %252 = vmatpush.msra.mxu0 %v239
    %253 = vmatpush.msra.mxu0 %v238
    %254 = vmatpush.msra.mxu0 %v237
    %255 = vmatpush.msra.mxu0 %v236
    %256 = vmatpush.msra.mxu0 %v235
    %257 = vmatpush.msra.mxu0 %v234
    %258 = vmatpush.msra.mxu0 %v233
    %259 = vmatpush.msra.mxu0 %v232
    %260 = vmatpush.msra.mxu0 %v231
    %261 = vmatpush.msra.mxu0 %v230
    %262 = vmatpush.msra.mxu0 %v229
    %263 = vmatpush.msra.mxu0 %v228
    %264 = vmatmul.f32.gmra.mxu0 %v227
    %v265 = vpop.f32.mrf.mxu0
    %v266 = vadd.f32 %v246, %v265
    %267 = vdwg.mxu0
    %v268 = vxor.u32 %v266, 2147483648
    %v269 = vmul.f32 %v268, 1.442695
    %v270 = vpow.pop %v269
    %v271 = vadd.f32 %v270, 1.0
    %v272 = vrcp.pop %v271
    %v273 = vmul.f32 %v271, %v272
    %v274 = vsub.f32 1.0, %v273
    %v275 = vmul.f32 %v272, %v274
    %v276 = vadd.f32 %v272, %v275
    %vm277 = vweird.f32 %v271
    %vm278 = vweird.f32 %v272
    %vm279 = vmor %vm277, %vm278
    %v280 = vsel %vm279, %v272, %v276
    %v281 = vand.u32 2147483647, %v271
    %vm282 = vcmp.eq.f32.partialorder %v281, 8.507059e+37
    %v283 = vand.u32 %v271, 2147483648
    %v284 = vor.u32 1.1754944e-38, %v283
    %v285 = vsel %vm282, %v284, %v280
    %v286 = vmul.f32 1.0, %v285
    %v287 = vld [vmem:[#allocation10] sm:$0xff]
    %v288 = vld [vmem:[#allocation10 + $0x8] sm:$0xff]
    %v289 = vld [vmem:[#allocation10 + $0x10] sm:$0xff]
    %v290 = vld [vmem:[#allocation10 + $0x18] sm:$0xff]
    %v291 = vld [vmem:[#allocation10 + $0x20] sm:$0xff]
    %v292 = vld [vmem:[#allocation10 + $0x28] sm:$0xff]
    %v293 = vld [vmem:[#allocation10 + $0x30] sm:$0xff]
    %v294 = vld [vmem:[#allocation10 + $0x38] sm:$0xff]
    %v295 = vld [vmem:[#allocation10 + $0x40] sm:$0xff]
    %v296 = vld [vmem:[#allocation10 + $0x48] sm:$0xff]
    %v297 = vld [vmem:[#allocation10 + $0x50] sm:$0xff]
    %v298 = vld [vmem:[#allocation10 + $0x58] sm:$0xff]
    %v299 = vld [vmem:[#allocation10 + $0x60] sm:$0xff]
    %v300 = vld [vmem:[#allocation10 + $0x68] sm:$0xff]
    %v301 = vld [vmem:[#allocation10 + $0x70] sm:$0xff]
    %v302 = vld [vmem:[#allocation10 + $0x78] sm:$0xff]
    %v303 = vld [vmem:[%s8] sm:$0x1]
    %v305 = vperm.slane %v303, 0
    %307 = vmatpush.msra.mxu0 %v302
    %308 = vmatpush.msra.mxu0 %v301
    %309 = vmatpush.msra.mxu0 %v300
    %310 = vmatpush.msra.mxu0 %v299
    %311 = vmatpush.msra.mxu0 %v298
    %312 = vmatpush.msra.mxu0 %v297
    %313 = vmatpush.msra.mxu0 %v296
    %314 = vmatpush.msra.mxu0 %v295
    %315 = vmatpush.msra.mxu0 %v294
    %316 = vmatpush.msra.mxu0 %v293
    %317 = vmatpush.msra.mxu0 %v292
    %318 = vmatpush.msra.mxu0 %v291
    %319 = vmatpush.msra.mxu0 %v290
    %320 = vmatpush.msra.mxu0 %v289
    %321 = vmatpush.msra.mxu0 %v288
    %322 = vmatpush.msra.mxu0 %v287
    %323 = vmatmul.f32.gmra.mxu0 %v286
    %v324 = vpop.f32.mrf.mxu0
    %v325 = vadd.f32 %v305, %v324
    %326 = vdwg.mxu0
    %v327 = vxor.u32 %v325, 2147483648
    %v328 = vmul.f32 %v327, 1.442695
    %v329 = vpow.pop %v328
    %v330 = vadd.f32 %v329, 1.0
    %v331 = vrcp.pop %v330
    %v332 = vmul.f32 %v330, %v331
    %v333 = vsub.f32 1.0, %v332
    %v334 = vmul.f32 %v331, %v333
    %v335 = vadd.f32 %v331, %v334
    %vm336 = vweird.f32 %v330
    %vm337 = vweird.f32 %v331
    %vm338 = vmor %vm336, %vm337
    %v339 = vsel %vm338, %v331, %v335
    %v340 = vand.u32 2147483647, %v330
    %vm341 = vcmp.eq.f32.partialorder %v340, 8.507059e+37
    %v342 = vand.u32 %v330, 2147483648
    %v343 = vor.u32 1.1754944e-38, %v342
    %v344 = vsel %vm341, %v343, %v339
    %v345 = vmul.f32 1.0, %v344
    %346 = vst [vmem:[#allocation11] sm:$0xff] %v345
    // Predicated region
    $region58: #{tpu_custom_call.1} parent=1 // pred_check
      _
    $region59: #{tpu_custom_call.1} parent=1 // pred_check_branch
      %348 = sbr.rel (0) target = $region61
    $region60: #{tpu_custom_call.1} parent=1 // pred_region
      %350 = vsyncadd [#allocation4], 0
      %s352 = sshll.u32 [#allocation11], 4
      %s353 = int_to_ptr.vmem [resolvable:$true] %s352
      %s354 = sshll.u32 %s9, 4
      %s355 = int_to_ptr.hbm [resolvable:$true] %s354
      %357 = dma.vmem_to_hbm [thread:$0]  %s353, 128, %s355, [#allocation4]
    $region61: #{tpu_custom_call.1} parent=1 // pred_fallthru
      _
    // Predicated region
    $region62: #{tpu_custom_call.1} parent=1 // pred_check
      _
    $region63: #{tpu_custom_call.1} parent=1 // pred_check_branch
      %359 = sbr.rel (0) target = $region65
    $region64: #{tpu_custom_call.1} parent=1 // pred_region
      %361 = dma.done [#allocation4], 128
    $region65: #{tpu_custom_call.1} parent=1 // pred_fallthru
      _
    %362 = vsyncpa [#allocation3], 1
    %363 = vsyncpa [#allocation6], 1
    %364 = vsyncpa [#allocation9], 1
    %365 = vsyncpa [#allocation4], 1

</llo_original>
